<compile_context>
chip_gen: v7x
topology: tpu7x:2x2x1
jax: 0.10.0
libtpu: 0.0.40
codegen_flags: <defaults>
</compile_context>

<pallas_src>
import functools

import jax
import jax.numpy as jnp
from jax.experimental import pallas as pl
from jax.experimental.pallas import tpu as pltpu

# Walker2DBulletEnv-v0 dimensions (fixed by the env spec)
STATE_DIM = 22
ACTION_DIM = 6
MAX_ACTION = 1.0
H1 = 400
H2 = 300

# Lane-padded widths (multiples of 128); padding is zero-filled so the math is
# unchanged (extra columns are 0 after relu / never stored at the output).
H1_PAD = 512
H2_PAD = 384
ACT_PAD = 128   # layer-3 matmul N (one MXU lane tile)
OUT_PAD = 8     # stored output width (>= ACTION_DIM); narrow HBM writeback

TILE_B = 1024   # max batch rows per grid step


def _round_up(n, m):
    return ((n + m - 1) // m) * m


def _cdiv(a, b):
    return -(-a // b)


def _actor_kernel(x_ref, w1_ref, b1_ref, w2_ref, b2_ref, w3_ref, b3_ref, o_ref):
    # layer 1: Linear(state_dim, 400) + ReLU  (bf16 MXU matmul, f32 accumulate)
    x = x_ref[...].astype(jnp.bfloat16)
    h = jnp.dot(x, w1_ref[...], preferred_element_type=jnp.float32) + b1_ref[...]
    h = jnp.maximum(h, 0.0)

    # layer 2: Linear(400, 300) + ReLU
    h = jnp.dot(h.astype(jnp.bfloat16), w2_ref[...],
                preferred_element_type=jnp.float32) + b2_ref[...]
    h = jnp.maximum(h, 0.0)

    # layer 3: Linear(300, action_dim), then max_action * tanh.
    # Matmul runs on the full 128-lane tile; only the first OUT_PAD columns are
    # real actions, so slice before the epilogue/store (narrow masked vst).
    h = jnp.dot(h.astype(jnp.bfloat16), w3_ref[...],
                preferred_element_type=jnp.float32)
    o_ref[...] = (MAX_ACTION * jnp.tanh(h[:, :OUT_PAD] + b3_ref[...])).astype(o_ref.dtype)


def pack_params(params):
    """Zero-pad logical f32 params to lane-aligned shapes; weights -> bf16."""
    def pad_w(w, rows, cols):
        out = jnp.zeros((rows, cols), jnp.float32)
        out = out.at[: w.shape[0], : w.shape[1]].set(w)
        return out.astype(jnp.bfloat16)

    def pad_b(b, cols):
        out = jnp.zeros((1, cols), jnp.float32)
        return out.at[:, : b.shape[1]].set(b)

    return {
        "w1": pad_w(params["w1"], STATE_DIM, H1_PAD),
        "b1": pad_b(params["b1"], H1_PAD),
        "w2": pad_w(params["w2"], H1_PAD, H2_PAD),
        "b2": pad_b(params["b2"], H2_PAD),
        "w3": pad_w(params["w3"], H2_PAD, ACT_PAD),
        "b3": pad_b(params["b3"], OUT_PAD),   # only the stored lanes need a bias
    }


def _tile_and_pad(B):
    """Minimal-padding batch tiling; >=2 grid steps for megacore when worthwhile."""
    n = max(1, _cdiv(B, TILE_B))
    if n == 1 and B >= 128:   # split so both v7x TensorCores get work
        n = 2
    tile_b = _round_up(_cdiv(B, n), 8)
    b_pad = n * tile_b
    return tile_b, b_pad, n


@jax.jit
def actor_forward(x, packed):
    """x: (B, STATE_DIM) f32. packed: output of pack_params. -> (B, ACTION_DIM) f32."""
    w1, b1 = packed["w1"], packed["b1"]
    w2, b2 = packed["w2"], packed["b2"]
    w3, b3 = packed["w3"], packed["b3"]

    B = x.shape[0]
    tile_b, b_pad, n_steps = _tile_and_pad(B)
    if b_pad != B:
        x = jnp.pad(x, ((0, b_pad - B), (0, 0)))
    grid = (n_steps,)

    # Weights/biases: full array, same block every step -> fetched once, VMEM-resident.
    resident = lambda shape: pl.BlockSpec(shape, lambda i: (0, 0))

    flops = 2 * b_pad * (STATE_DIM * H1_PAD + H1_PAD * H2_PAD + H2_PAD * ACT_PAD)
    bytes_accessed = (
        x.size * 4
        + (w1.size + w2.size + w3.size) * 2
        + (b1.size + b2.size + b3.size) * 4
        + b_pad * OUT_PAD * 4
    )

    out = pl.pallas_call(
        _actor_kernel,
        out_shape=jax.ShapeDtypeStruct((b_pad, OUT_PAD), jnp.float32),
        grid=grid,
        in_specs=[
            pl.BlockSpec((tile_b, STATE_DIM), lambda i: (i, 0)),
            resident(w1.shape), resident(b1.shape),
            resident(w2.shape), resident(b2.shape),
            resident(w3.shape), resident(b3.shape),
        ],
        out_specs=pl.BlockSpec((tile_b, OUT_PAD), lambda i: (i, 0)),
        compiler_params=pltpu.CompilerParams(
            dimension_semantics=("parallel",)),
        cost_estimate=pl.CostEstimate(
            flops=flops,
            transcendentals=b_pad * OUT_PAD,
            bytes_accessed=bytes_accessed),
    )(x, w1, b1, w2, b2, w3, b3)

    return out[:B, :ACTION_DIM]


def init_params(key):
    """Deterministic init mimicking PyTorch nn.Linear default (uniform ±1/sqrt(fan_in))."""
    ks = jax.random.split(key, 6)

    def linear(kw, kb, fan_in, fan_out):
        bound = 1.0 / jnp.sqrt(float(fan_in))
        w = jax.random.uniform(kw, (fan_in, fan_out), jnp.float32, -bound, bound)
        b = jax.random.uniform(kb, (1, fan_out), jnp.float32, -bound, bound)
        return w, b

    w1, b1 = linear(ks[0], ks[1], STATE_DIM, H1)
    w2, b2 = linear(ks[2], ks[3], H1, H2)
    w3, b3 = linear(ks[4], ks[5], H2, ACTION_DIM)
    return {"w1": w1, "b1": b1, "w2": w2, "b2": b2, "w3": w3, "b3": b3}


def actor_ref(x, params):
    """Pure-JAX f32 reference (logical, unpadded weights) for correctness check."""
    h = jnp.maximum(x @ params["w1"] + params["b1"], 0.0)
    h = jnp.maximum(h @ params["w2"] + params["b2"], 0.0)
    return MAX_ACTION * jnp.tanh(h @ params["w3"] + params["b3"])


if __name__ == "__main__":
    key = jax.random.PRNGKey(0)
    k_param, k_x = jax.random.split(key)

    params = init_params(k_param)
    packed = pack_params(params)

    # Small acting-time batch (grid = 1)
    batch = 2
    x = jax.random.normal(k_x, (batch, STATE_DIM), jnp.float32)
    out = jax.block_until_ready(actor_forward(x, packed))
    ref = actor_ref(x, params)
    assert out.shape == (batch, ACTION_DIM)
    # bf16 weights/activations in the matmuls -> relaxed tolerance vs f32 ref.
    assert jnp.allclose(out, ref, atol=2e-2, rtol=2e-2), (
        f"max abs err {jnp.max(jnp.abs(out - ref))}")

    # Larger, non-multiple batch exercising the minimal-padding / 2-step path.
    batch2 = 300
    x2 = jax.random.normal(jax.random.PRNGKey(1), (batch2, STATE_DIM), jnp.float32)
    out2 = jax.block_until_ready(actor_forward(x2, packed))
    ref2 = actor_ref(x2, params)
    assert out2.shape == (batch2, ACTION_DIM)
    assert jnp.allclose(out2, ref2, atol=2e-2, rtol=2e-2), (
        f"max abs err {jnp.max(jnp.abs(out2 - ref2))}")

    print("KERNEL_OK")
</pallas_src>

<mosaic_0001>
module attributes {stable_mosaic.version = 11 : i64} {
  func.func @_actor_kernel(%arg0: i32, %arg1: memref<8x22xf32, #tpu.memory_space<vmem>>, %arg2: memref<22x512xbf16, #tpu.memory_space<vmem>>, %arg3: memref<1x512xf32, #tpu.memory_space<vmem>>, %arg4: memref<512x384xbf16, #tpu.memory_space<vmem>>, %arg5: memref<1x384xf32, #tpu.memory_space<vmem>>, %arg6: memref<384x128xbf16, #tpu.memory_space<vmem>>, %arg7: memref<1x8xf32, #tpu.memory_space<vmem>>, %arg8: memref<8x8xf32, #tpu.memory_space<vmem>>) attributes {dimension_semantics = [#tpu.dimension_semantics<parallel>], iteration_bounds = array<i64: 1>, scalar_prefetch = 0 : i64, scratch_operands = 0 : i64, tpu.core_type = #tpu.core_type<tc>, window_params = [{transform_indices = @transform_0, window_bounds = array<i64: 8, 22>}, {pipeline_mode = #tpu.pipeline_mode<synchronous>, transform_indices = @transform_1, window_bounds = array<i64: 22, 512>}, {pipeline_mode = #tpu.pipeline_mode<synchronous>, transform_indices = @transform_2, window_bounds = array<i64: 1, 512>}, {pipeline_mode = #tpu.pipeline_mode<synchronous>, transform_indices = @transform_3, window_bounds = array<i64: 512, 384>}, {pipeline_mode = #tpu.pipeline_mode<synchronous>, transform_indices = @transform_4, window_bounds = array<i64: 1, 384>}, {pipeline_mode = #tpu.pipeline_mode<synchronous>, transform_indices = @transform_5, window_bounds = array<i64: 384, 128>}, {pipeline_mode = #tpu.pipeline_mode<synchronous>, transform_indices = @transform_6, window_bounds = array<i64: 1, 8>}, {transform_indices = @transform_7, window_bounds = array<i64: 8, 8>}]} {
    %c0 = arith.constant 0 : index
    %c0_0 = arith.constant 0 : index
    %0 = vector.load %arg1[%c0, %c0_0] : memref<8x22xf32, #tpu.memory_space<vmem>>, vector<8x22xf32>
    %1 = arith.truncf %0 : vector<8x22xf32> to vector<8x22xbf16>
    %c0_1 = arith.constant 0 : index
    %c0_2 = arith.constant 0 : index
    %2 = vector.load %arg2[%c0_1, %c0_2] : memref<22x512xbf16, #tpu.memory_space<vmem>>, vector<22x512xbf16>
    %cst = arith.constant dense<0.000000e+00> : vector<8x512xf32>
    %3 = tpu.matmul %1, %2, %cst {dimension_numbers = #tpu.dot_dimension_numbers<[1], [0], [0], [1], [0, 0, 1, 1], [], []>} : vector<8x22xbf16>, vector<22x512xbf16>, vector<8x512xf32> -> vector<8x512xf32>
    %c0_3 = arith.constant 0 : index
    %c0_4 = arith.constant 0 : index
    %4 = vector.load %arg3[%c0_3, %c0_4] : memref<1x512xf32, #tpu.memory_space<vmem>>, vector<1x512xf32>
    %5 = vector.broadcast %4 : vector<1x512xf32> to vector<8x512xf32>
    %6 = arith.addf %3, %5 : vector<8x512xf32>
    %cst_5 = arith.constant 0.000000e+00 : f32
    %7 = vector.broadcast %cst_5 : f32 to vector<8x512xf32>
    %8 = arith.maximumf %6, %7 : vector<8x512xf32>
    %9 = arith.truncf %8 : vector<8x512xf32> to vector<8x512xbf16>
    %c0_6 = arith.constant 0 : index
    %c0_7 = arith.constant 0 : index
    %10 = vector.load %arg4[%c0_6, %c0_7] : memref<512x384xbf16, #tpu.memory_space<vmem>>, vector<512x384xbf16>
    %cst_8 = arith.constant dense<0.000000e+00> : vector<8x384xf32>
    %11 = tpu.matmul %9, %10, %cst_8 {dimension_numbers = #tpu.dot_dimension_numbers<[1], [0], [0], [1], [0, 0, 1, 1], [], []>} : vector<8x512xbf16>, vector<512x384xbf16>, vector<8x384xf32> -> vector<8x384xf32>
    %c0_9 = arith.constant 0 : index
    %c0_10 = arith.constant 0 : index
    %12 = vector.load %arg5[%c0_9, %c0_10] : memref<1x384xf32, #tpu.memory_space<vmem>>, vector<1x384xf32>
    %13 = vector.broadcast %12 : vector<1x384xf32> to vector<8x384xf32>
    %14 = arith.addf %11, %13 : vector<8x384xf32>
    %cst_11 = arith.constant 0.000000e+00 : f32
    %15 = vector.broadcast %cst_11 : f32 to vector<8x384xf32>
    %16 = arith.maximumf %14, %15 : vector<8x384xf32>
    %17 = arith.truncf %16 : vector<8x384xf32> to vector<8x384xbf16>
    %c0_12 = arith.constant 0 : index
    %c0_13 = arith.constant 0 : index
    %18 = vector.load %arg6[%c0_12, %c0_13] : memref<384x128xbf16, #tpu.memory_space<vmem>>, vector<384x128xbf16>
    %cst_14 = arith.constant dense<0.000000e+00> : vector<8x128xf32>
    %19 = tpu.matmul %17, %18, %cst_14 {dimension_numbers = #tpu.dot_dimension_numbers<[1], [0], [0], [1], [0, 0, 1, 1], [], []>} : vector<8x384xbf16>, vector<384x128xbf16>, vector<8x128xf32> -> vector<8x128xf32>
    %20 = vector.extract_strided_slice %19 {offsets = [0, 0], sizes = [8, 8], strides = [1, 1]} : vector<8x128xf32> to vector<8x8xf32>
    %c0_15 = arith.constant 0 : index
    %c0_16 = arith.constant 0 : index
    %21 = vector.load %arg7[%c0_15, %c0_16] : memref<1x8xf32, #tpu.memory_space<vmem>>, vector<1x8xf32>
    %22 = vector.broadcast %21 : vector<1x8xf32> to vector<8x8xf32>
    %23 = arith.addf %20, %22 : vector<8x8xf32>
    %24 = math.tanh %23 : vector<8x8xf32>
    %cst_17 = arith.constant 1.000000e+00 : f32
    %25 = vector.broadcast %cst_17 : f32 to vector<8x8xf32>
    %26 = arith.mulf %25, %24 : vector<8x8xf32>
    %c0_18 = arith.constant 0 : index
    %c0_19 = arith.constant 0 : index
    %27 = vector.load %arg8[%c0_18, %c0_19] : memref<8x8xf32, #tpu.memory_space<vmem>>, vector<8x8xf32>
    tpu.vector_store %arg8[%c0_18, %c0_19], %26 {strides = array<i32>} : memref<8x8xf32, #tpu.memory_space<vmem>>, vector<8x8xf32>,
    return
  }
  func.func @transform_0(%arg0: i32) -> (i32, i32) {
    %c0_i32 = arith.constant 0 : i32
    %c0_i32_0 = arith.constant 0 : i32
    return %arg0, %c0_i32 : i32, i32
  }
  func.func @transform_1(%arg0: i32) -> (i32, i32) {
    %c0_i32 = arith.constant 0 : i32
    %c0_i32_0 = arith.constant 0 : i32
    %c0_i32_1 = arith.constant 0 : i32
    return %c0_i32, %c0_i32_0 : i32, i32
  }
  func.func @transform_2(%arg0: i32) -> (i32, i32) {
    %c0_i32 = arith.constant 0 : i32
    %c0_i32_0 = arith.constant 0 : i32
    %c0_i32_1 = arith.constant 0 : i32
    return %c0_i32, %c0_i32_0 : i32, i32
  }
  func.func @transform_3(%arg0: i32) -> (i32, i32) {
    %c0_i32 = arith.constant 0 : i32
    %c0_i32_0 = arith.constant 0 : i32
    %c0_i32_1 = arith.constant 0 : i32
    return %c0_i32, %c0_i32_0 : i32, i32
  }
  func.func @transform_4(%arg0: i32) -> (i32, i32) {
    %c0_i32 = arith.constant 0 : i32
    %c0_i32_0 = arith.constant 0 : i32
    %c0_i32_1 = arith.constant 0 : i32
    return %c0_i32, %c0_i32_0 : i32, i32
  }
  func.func @transform_5(%arg0: i32) -> (i32, i32) {
    %c0_i32 = arith.constant 0 : i32
    %c0_i32_0 = arith.constant 0 : i32
    %c0_i32_1 = arith.constant 0 : i32
    return %c0_i32, %c0_i32_0 : i32, i32
  }
  func.func @transform_6(%arg0: i32) -> (i32, i32) {
    %c0_i32 = arith.constant 0 : i32
    %c0_i32_0 = arith.constant 0 : i32
    %c0_i32_1 = arith.constant 0 : i32
    return %c0_i32, %c0_i32_0 : i32, i32
  }
  func.func @transform_7(%arg0: i32) -> (i32, i32) {
    %c0_i32 = arith.constant 0 : i32
    %c0_i32_0 = arith.constant 0 : i32
    return %arg0, %c0_i32 : i32, i32
  }
}

</mosaic_0001>

<llo_original>
// kernel: actor_forward.1
$region0: #{actor_forward.1}
  #allocation0 [shape = 'u32[]', space=smem, size = 0x4, offset = 0x4, fixed_abs, tag = 'smem constant byte address 0x4 - core index']
  #allocation1 [shape = 'u32[144,128]{1,0:T(1,128)}', space=vmem, size = 0x12000, scoped, tag = 'internal scratch']
  %s0 = inlined_call_operand.vmem [shape: f32[8,22], index: 0, kind: input, shape index: {}]
  %s1 = inlined_call_operand.hbm [shape: bf16[22,512], index: 1, kind: input, shape index: {}]
  %s2 = inlined_call_operand.vmem [shape: f32[1,512], index: 2, kind: input, shape index: {}]
  %s3 = inlined_call_operand.hbm [shape: bf16[512,384], index: 3, kind: input, shape index: {}]
  %s4 = inlined_call_operand.vmem [shape: f32[1,384], index: 4, kind: input, shape index: {}]
  %s5 = inlined_call_operand.hbm [shape: bf16[384,128], index: 5, kind: input, shape index: {}]
  %s6 = inlined_call_operand.vmem [shape: f32[1,8], index: 6, kind: input, shape index: {}]
  %s7 = inlined_call_operand.vmem [shape: f32[8,8], index: 7, kind: output, shape index: {}]
  %s8 = sld [smem:[#allocation0]]
  $region50: #{actor_forward.1} parent=0
    _
  %s10 = ssub.s32 1, %s8
  %s11 = scalar_select 0, %s10, %s8
  $region1: #{actor_forward.1} parent=0
    #allocation2 [shape = 'u8[24576]{0}', space=vmem, size = 0x6000, scoped, tag = 'input window, operand 1, single buffered']
    #allocation3 [shape = 's32[1]{0}', space=sflag, size = 0x4, scoped, tag = 'scoped memory for actor_forward.1']
    #allocation4 [shape = 'u8[393216]{0}', space=vmem, size = 0x60000, scoped, tag = 'input window, operand 3, single buffered']
    #allocation5 [shape = 's32[1]{0}', space=sflag, size = 0x4, scoped, tag = 'scoped memory for actor_forward.1']
    #allocation6 [shape = 'u8[98304]{0}', space=vmem, size = 0x18000, scoped, tag = 'input window, operand 5, single buffered']
    %12 = vsyncpa [#allocation3], 0
    %13 = vsyncpa [#allocation5], 0
    // Predicated region
    $region2: #{actor_forward.1} parent=1 // pred_check
      _
    $region3: #{actor_forward.1} parent=1 // pred_check_branch
      %15 = sbr.rel (0) target = $region5
    $region4: #{actor_forward.1} parent=1 // pred_region
      _
    $region5: #{actor_forward.1} parent=1 // pred_fallthru
      _
    // Predicated region
    $region6: #{actor_forward.1} parent=1 // pred_check
      _
    $region7: #{actor_forward.1} parent=1 // pred_check_branch
      %17 = sbr.rel (0) target = $region9
    $region8: #{actor_forward.1} parent=1 // pred_region
      %s19 = ssub.s32 768, 768
      %20 = vsyncadd [#allocation3], %s19
      %s21 = sshll.u32 [#allocation2], 4
      %s22 = int_to_ptr.vmem [resolvable:$true] %s21
      %27 = dma.hbm_to_vmem [thread:$0]  %s1, 768, %s22, [#allocation3], 256, 256, 16
    $region9: #{actor_forward.1} parent=1 // pred_fallthru
      _
    // Predicated region
    $region10: #{actor_forward.1} parent=1 // pred_check
      _
    $region11: #{actor_forward.1} parent=1 // pred_check_branch
      %29 = sbr.rel (0) target = $region13
    $region12: #{actor_forward.1} parent=1 // pred_region
      _
    $region13: #{actor_forward.1} parent=1 // pred_fallthru
      _
    // Predicated region
    $region14: #{actor_forward.1} parent=1 // pred_check
      _
    $region15: #{actor_forward.1} parent=1 // pred_check_branch
      %31 = sbr.rel (0) target = $region17
    $region16: #{actor_forward.1} parent=1 // pred_region
      %s33 = ssub.s32 12288, 12288
      %34 = vsyncadd [#allocation5], %s33
      %s35 = sshll.u32 [#allocation4], 4
      %s36 = int_to_ptr.vmem [resolvable:$true] %s35
      %41 = dma.hbm_to_vmem [thread:$0]  %s3, 12288, %s36, [#allocation5], 192, 192, 12
    $region17: #{actor_forward.1} parent=1 // pred_fallthru
      _
    // Predicated region
    $region18: #{actor_forward.1} parent=1 // pred_check
      _
    $region19: #{actor_forward.1} parent=1 // pred_check_branch
      %43 = sbr.rel (0) target = $region21
    $region20: #{actor_forward.1} parent=1 // pred_region
      _
    $region21: #{actor_forward.1} parent=1 // pred_fallthru
      _
    // Predicated region
    $region22: #{actor_forward.1} parent=1 // pred_check
      _
    $region23: #{actor_forward.1} parent=1 // pred_check_branch
      %45 = sbr.rel (0) target = $region25
    $region24: #{actor_forward.1} parent=1 // pred_region
      %s47 = ssub.s32 3072, 3072
      %48 = vsyncadd [#allocation5], %s47
      %s49 = sshll.u32 [#allocation6], 4
      %s50 = int_to_ptr.vmem [resolvable:$true] %s49
      %55 = dma.hbm_to_vmem [thread:$0]  %s5, 3072, %s50, [#allocation5], 64, 64, 4
    $region25: #{actor_forward.1} parent=1 // pred_fallthru
      _
    // Predicated region
    $region26: #{actor_forward.1} parent=1 // pred_check
      _
    $region27: #{actor_forward.1} parent=1 // pred_check_branch
      %57 = sbr.rel (0) target = $region29
    $region28: #{actor_forward.1} parent=1 // pred_region
      _
    $region29: #{actor_forward.1} parent=1 // pred_fallthru
      _
    // Predicated region
    $region30: #{actor_forward.1} parent=1 // pred_check
      _
    $region31: #{actor_forward.1} parent=1 // pred_check_branch
      %59 = sbr.rel (0) target = $region33
    $region32: #{actor_forward.1} parent=1 // pred_region
      %60 = dma.done [#allocation3], 768
    $region33: #{actor_forward.1} parent=1 // pred_fallthru
      _
    // Predicated region
    $region34: #{actor_forward.1} parent=1 // pred_check
      _
    $region35: #{actor_forward.1} parent=1 // pred_check_branch
      %62 = sbr.rel (0) target = $region37
    $region36: #{actor_forward.1} parent=1 // pred_region
      %63 = dma.done [#allocation5], 12288
    $region37: #{actor_forward.1} parent=1 // pred_fallthru
      _
    // Predicated region
    $region38: #{actor_forward.1} parent=1 // pred_check
      _
    $region39: #{actor_forward.1} parent=1 // pred_check_branch
      %65 = sbr.rel (0) target = $region41
    $region40: #{actor_forward.1} parent=1 // pred_region
      %66 = dma.done [#allocation5], 3072
    $region41: #{actor_forward.1} parent=1 // pred_fallthru
      _
    %v68 = vld [vmem:[%s0] sm:$0xff]
    %v69 = vpack.c.bf16 %v68, %v68
    %v70 = vld [vmem:[#allocation2] sm:$0xff]
    %v71 = vld [vmem:[#allocation2 + $0x8] sm:$0xff]
    %v72 = vld [vmem:[#allocation2 + $0x10] sm:$0xff]
    %v73 = vld [vmem:[#allocation2 + $0x18] sm:$0xff]
    %v74 = vld [vmem:[#allocation2 + $0x20] sm:$0x77]
    %v75 = vld [vmem:[#allocation2 + $0x28] sm:$0x77]
    %v76 = vld [vmem:[%s2] sm:$0xf]
    %v78 = vlaneseq
    %v79 = vshrl.u32 %v78, 7
    %v80 = vsub.s32 0, %v79
    %v81 = vrot.slane %v76, %v80
    %v82 = vlaneseq
    %v83 = vshrl.u32 %v82, 7
    %v84 = vsub.s32 1, %v83
    %v85 = vrot.slane %v76, %v84
    %v86 = vlaneseq
    %v87 = vshrl.u32 %v86, 7
    %v88 = vsub.s32 2, %v87
    %v89 = vrot.slane %v76, %v88
    %v90 = vlaneseq
    %v91 = vshrl.u32 %v90, 7
    %v92 = vsub.s32 3, %v91
    %v93 = vrot.slane %v76, %v92
    %v104 = vunpack.c.l.b16 %v70
    %v105 = vunpack.c.h.b16 %v70
    %v106 = vunpack.c.l.b16 %v71
    %v107 = vunpack.c.h.b16 %v71
    %v108 = vunpack.c.l.b16 %v72
    %v109 = vunpack.c.h.b16 %v72
    %v110 = vunpack.c.l.b16 %v73
    %v111 = vunpack.c.h.b16 %v73
    %v112 = vunpack.c.l.b16 %v74
    %v113 = vunpack.c.h.b16 %v74
    %v114 = vunpack.c.l.b16 %v75
    %v115 = vunpack.c.h.b16 %v75
    %v116 = vpack.c.b16 %v108, %v104
    %v117 = vpack.c.b16 %v109, %v105
    %v118 = vpack.c.b16 %v110, %v106
    %v119 = vpack.c.b16 %v111, %v107
    %v120 = vpack.c.b16 %v112, %v112
    %v121 = vpack.c.b16 %v113, %v113
    %v122 = vpack.c.b16 %v114, %v114
    %v123 = vpack.c.b16 %v115, %v115
    %vm128 = vcmask 179200
    %v130 = vsel %vm128, %v69, 0
    %vm132 = vcmask 1042432
    %v134 = vsel %vm132, %v120, 0
    %v137 = vsel %vm132, %v121, 0
    %v140 = vsel %vm132, %v122, 0
    %v143 = vsel %vm132, %v123, 0
    %145 = vmatprep.subr.bf16.mxu0 %v117
    %146 = vmatpush1.bf16.msra.mxu0 %v116
    %147 = vmatprep.subr.bf16.mxu0 %v137
    %148 = vmatpush1.bf16.msra.mxu0 %v134
    %149 = vmatprep.subr.bf16.mxu0 0
    %150 = vmatpush1.bf16.msra.mxu0 0
    %151 = vmatprep.subr.bf16.mxu0 0
    %152 = vmatpush1.bf16.msra.mxu0 0
    %153 = vmatprep.subr.bf16.mxu0 0
    %154 = vmatpush1.bf16.msra.mxu0 0
    %155 = vmatprep.subr.bf16.mxu0 0
    %156 = vmatpush1.bf16.msra.mxu0 0
    %157 = vmatprep.subr.bf16.mxu0 0
    %158 = vmatpush1.bf16.msra.mxu0 0
    %159 = vmatprep.subr.bf16.mxu0 0
    %160 = vmatpush1.bf16.msra.mxu0 0
    %161 = vmatprep.subr.bf16.mxu0 0
    %162 = vmatpush1.bf16.msra.mxu0 0
    %163 = vmatprep.subr.bf16.mxu0 0
    %164 = vmatpush1.bf16.msra.mxu0 0
    %165 = vmatprep.subr.bf16.mxu0 0
    %166 = vmatpush1.bf16.msra.mxu0 0
    %167 = vmatprep.subr.bf16.mxu0 0
    %168 = vmatpush1.bf16.msra.mxu0 0
    %169 = vmatprep.subr.bf16.mxu0 0
    %170 = vmatpush1.bf16.msra.mxu0 0
    %171 = vmatprep.subr.bf16.mxu0 0
    %172 = vmatpush1.bf16.msra.mxu0 0
    %173 = vmatprep.subr.bf16.mxu0 0
    %174 = vmatpush1.bf16.msra.mxu0 0
    %175 = vmatprep.subr.bf16.mxu0 0
    %176 = vmatpush1.bf16.msra.mxu0 0
    %177 = vmatprep.mubr.bf16.mxu0 0
    %178 = vmatmul.mubr.bf16.gmra.mrb[0].mxu0 %v130
    %v179 = vpop.f32.mrb[0].mxu0
    %v180 = vadd.f32 %v81, %v179
    %v181 = vpop.f32.mrb[0].mxu0
    %v182 = vadd.f32 %v85, %v181
    %v183 = vpop.f32.mrb[0].mxu0
    %v184 = vpop.f32.mrb[0].mxu0
    %185 = vdwg.mxu0
    %186 = vmatprep.subr.bf16.mxu0 %v119
    %187 = vmatpush1.bf16.msra.mxu0 %v118
    %188 = vmatprep.subr.bf16.mxu0 %v143
    %189 = vmatpush1.bf16.msra.mxu0 %v140
    %190 = vmatprep.subr.bf16.mxu0 0
    %191 = vmatpush1.bf16.msra.mxu0 0
    %192 = vmatprep.subr.bf16.mxu0 0
    %193 = vmatpush1.bf16.msra.mxu0 0
    %194 = vmatprep.subr.bf16.mxu0 0
    %195 = vmatpush1.bf16.msra.mxu0 0
    %196 = vmatprep.subr.bf16.mxu0 0
    %197 = vmatpush1.bf16.msra.mxu0 0
    %198 = vmatprep.subr.bf16.mxu0 0
    %199 = vmatpush1.bf16.msra.mxu0 0
    %200 = vmatprep.subr.bf16.mxu0 0
    %201 = vmatpush1.bf16.msra.mxu0 0
    %202 = vmatprep.subr.bf16.mxu0 0
    %203 = vmatpush1.bf16.msra.mxu0 0
    %204 = vmatprep.subr.bf16.mxu0 0
    %205 = vmatpush1.bf16.msra.mxu0 0
    %206 = vmatprep.subr.bf16.mxu0 0
    %207 = vmatpush1.bf16.msra.mxu0 0
    %208 = vmatprep.subr.bf16.mxu0 0
    %209 = vmatpush1.bf16.msra.mxu0 0
    %210 = vmatprep.subr.bf16.mxu0 0
    %211 = vmatpush1.bf16.msra.mxu0 0
    %212 = vmatprep.subr.bf16.mxu0 0
    %213 = vmatpush1.bf16.msra.mxu0 0
    %214 = vmatprep.subr.bf16.mxu0 0
    %215 = vmatpush1.bf16.msra.mxu0 0
    %216 = vmatprep.subr.bf16.mxu0 0
    %217 = vmatpush1.bf16.msra.mxu0 0
    %218 = vmatprep.mubr.bf16.mxu0 0
    %219 = vmatmul.mubr.bf16.gmra.mrb[0].mxu0 %v130
    %v220 = vpop.f32.mrb[0].mxu0
    %v221 = vadd.f32 %v89, %v220
    %v222 = vpop.f32.mrb[0].mxu0
    %v223 = vadd.f32 %v93, %v222
    %v224 = vpop.f32.mrb[0].mxu0
    %v225 = vpop.f32.mrb[0].mxu0
    %226 = vdwg.mxu0
    %v227 = vmax.f32 %v180, 0.0
    %v228 = vmax.f32 %v182, 0.0
    %v229 = vmax.f32 %v221, 0.0
    %v230 = vmax.f32 %v223, 0.0
    %v231 = vpack.c.bf16 %v227, %v227
    %v232 = vpack.c.bf16 %v228, %v228
    %v233 = vpack.c.bf16 %v229, %v229
    %v234 = vpack.c.bf16 %v230, %v230
    %v235 = vld [vmem:[#allocation4] sm:$0xff]
    %v236 = vld [vmem:[#allocation4 + $0x8] sm:$0xf]
    %v237 = vld [vmem:[#allocation4 + $0xc] sm:$0xff]
    %v238 = vld [vmem:[#allocation4 + $0x14] sm:$0xf]
    %v239 = vld [vmem:[#allocation4 + $0x18] sm:$0xff]
    %v240 = vld [vmem:[#allocation4 + $0x20] sm:$0xf]
    %v241 = vld [vmem:[#allocation4 + $0x24] sm:$0xff]
    %v242 = vld [vmem:[#allocation4 + $0x2c] sm:$0xf]
    %v243 = vld [vmem:[#allocation4 + $0x30] sm:$0xff]
    %v244 = vld [vmem:[#allocation4 + $0x38] sm:$0xf]
    %v245 = vld [vmem:[#allocation4 + $0x3c] sm:$0xff]
    %v246 = vld [vmem:[#allocation4 + $0x44] sm:$0xf]
    %v247 = vld [vmem:[#allocation4 + $0x48] sm:$0xff]
    %v248 = vld [vmem:[#allocation4 + $0x50] sm:$0xf]
    %v249 = vld [vmem:[#allocation4 + $0x54] sm:$0xff]
    %v250 = vld [vmem:[#allocation4 + $0x5c] sm:$0xf]
    %v251 = vld [vmem:[#allocation4 + $0x60] sm:$0xff]
    %v252 = vld [vmem:[#allocation4 + $0x68] sm:$0xf]
    %v253 = vld [vmem:[#allocation4 + $0x6c] sm:$0xff]
    %v254 = vld [vmem:[#allocation4 + $0x74] sm:$0xf]
    %v255 = vld [vmem:[#allocation4 + $0x78] sm:$0xff]
    %v256 = vld [vmem:[#allocation4 + $0x80] sm:$0xf]
    %v257 = vld [vmem:[#allocation4 + $0x84] sm:$0xff]
    %v258 = vld [vmem:[#allocation4 + $0x8c] sm:$0xf]
    %v259 = vld [vmem:[#allocation4 + $0x90] sm:$0xff]
    %v260 = vld [vmem:[#allocation4 + $0x98] sm:$0xf]
    %v261 = vld [vmem:[#allocation4 + $0x9c] sm:$0xff]
    %v262 = vld [vmem:[#allocation4 + $0xa4] sm:$0xf]
    %v263 = vld [vmem:[#allocation4 + $0xa8] sm:$0xff]
    %v264 = vld [vmem:[#allocation4 + $0xb0] sm:$0xf]
    %v265 = vld [vmem:[#allocation4 + $0xb4] sm:$0xff]
    %v266 = vld [vmem:[#allocation4 + $0xbc] sm:$0xf]
    %v267 = vld [vmem:[#allocation4 + $0xc0] sm:$0xff]
    %v268 = vld [vmem:[#allocation4 + $0xc8] sm:$0xf]
    %v269 = vld [vmem:[#allocation4 + $0xcc] sm:$0xff]
    %v270 = vld [vmem:[#allocation4 + $0xd4] sm:$0xf]
    %v271 = vld [vmem:[#allocation4 + $0xd8] sm:$0xff]
    %v272 = vld [vmem:[#allocation4 + $0xe0] sm:$0xf]
    %v273 = vld [vmem:[#allocation4 + $0xe4] sm:$0xff]
    %v274 = vld [vmem:[#allocation4 + $0xec] sm:$0xf]
    %v275 = vld [vmem:[#allocation4 + $0xf0] sm:$0xff]
    %v276 = vld [vmem:[#allocation4 + $0xf8] sm:$0xf]
    %v277 = vld [vmem:[#allocation4 + $0xfc] sm:$0xff]
    %v278 = vld [vmem:[#allocation4 + $0x104] sm:$0xf]
    %v279 = vld [vmem:[#allocation4 + $0x108] sm:$0xff]
    %v280 = vld [vmem:[#allocation4 + $0x110] sm:$0xf]
    %v281 = vld [vmem:[#allocation4 + $0x114] sm:$0xff]
    %v282 = vld [vmem:[#allocation4 + $0x11c] sm:$0xf]
    %v283 = vld [vmem:[#allocation4 + $0x120] sm:$0xff]
    %v284 = vld [vmem:[#allocation4 + $0x128] sm:$0xf]
    %v285 = vld [vmem:[#allocation4 + $0x12c] sm:$0xff]
    %v286 = vld [vmem:[#allocation4 + $0x134] sm:$0xf]
    %v287 = vld [vmem:[#allocation4 + $0x138] sm:$0xff]
    %v288 = vld [vmem:[#allocation4 + $0x140] sm:$0xf]
    %v289 = vld [vmem:[#allocation4 + $0x144] sm:$0xff]
    %v290 = vld [vmem:[#allocation4 + $0x14c] sm:$0xf]
    %v291 = vld [vmem:[#allocation4 + $0x150] sm:$0xff]
    %v292 = vld [vmem:[#allocation4 + $0x158] sm:$0xf]
    %v293 = vld [vmem:[#allocation4 + $0x15c] sm:$0xff]
    %v294 = vld [vmem:[#allocation4 + $0x164] sm:$0xf]
    %v295 = vld [vmem:[#allocation4 + $0x168] sm:$0xff]
    %v296 = vld [vmem:[#allocation4 + $0x170] sm:$0xf]
    %v297 = vld [vmem:[#allocation4 + $0x174] sm:$0xff]
    %v298 = vld [vmem:[#allocation4 + $0x17c] sm:$0xf]
    %v299 = vld [vmem:[#allocation4 + $0x180] sm:$0xff]
    %v300 = vld [vmem:[#allocation4 + $0x188] sm:$0xf]
    %v301 = vld [vmem:[#allocation4 + $0x18c] sm:$0xff]
    %v302 = vld [vmem:[#allocation4 + $0x194] sm:$0xf]
    %v303 = vld [vmem:[#allocation4 + $0x198] sm:$0xff]
    %v304 = vld [vmem:[#allocation4 + $0x1a0] sm:$0xf]
    %v305 = vld [vmem:[#allocation4 + $0x1a4] sm:$0xff]
    %v306 = vld [vmem:[#allocation4 + $0x1ac] sm:$0xf]
    %v307 = vld [vmem:[#allocation4 + $0x1b0] sm:$0xff]
    %v308 = vld [vmem:[#allocation4 + $0x1b8] sm:$0xf]
    %v309 = vld [vmem:[#allocation4 + $0x1bc] sm:$0xff]
    %v310 = vld [vmem:[#allocation4 + $0x1c4] sm:$0xf]
    %v311 = vld [vmem:[#allocation4 + $0x1c8] sm:$0xff]
    %v312 = vld [vmem:[#allocation4 + $0x1d0] sm:$0xf]
    %v313 = vld [vmem:[#allocation4 + $0x1d4] sm:$0xff]
    %v314 = vld [vmem:[#allocation4 + $0x1dc] sm:$0xf]
    %v315 = vld [vmem:[#allocation4 + $0x1e0] sm:$0xff]
    %v316 = vld [vmem:[#allocation4 + $0x1e8] sm:$0xf]
    %v317 = vld [vmem:[#allocation4 + $0x1ec] sm:$0xff]
    %v318 = vld [vmem:[#allocation4 + $0x1f4] sm:$0xf]
    %v319 = vld [vmem:[#allocation4 + $0x1f8] sm:$0xff]
    %v320 = vld [vmem:[#allocation4 + $0x200] sm:$0xf]
    %v321 = vld [vmem:[#allocation4 + $0x204] sm:$0xff]
    %v322 = vld [vmem:[#allocation4 + $0x20c] sm:$0xf]
    %v323 = vld [vmem:[#allocation4 + $0x210] sm:$0xff]
    %v324 = vld [vmem:[#allocation4 + $0x218] sm:$0xf]
    %v325 = vld [vmem:[#allocation4 + $0x21c] sm:$0xff]
    %v326 = vld [vmem:[#allocation4 + $0x224] sm:$0xf]
    %v327 = vld [vmem:[#allocation4 + $0x228] sm:$0xff]
    %v328 = vld [vmem:[#allocation4 + $0x230] sm:$0xf]
    %v329 = vld [vmem:[#allocation4 + $0x234] sm:$0xff]
    %v330 = vld [vmem:[#allocation4 + $0x23c] sm:$0xf]
    %v331 = vld [vmem:[#allocation4 + $0x240] sm:$0xff]
    %v332 = vld [vmem:[#allocation4 + $0x248] sm:$0xf]
    %v333 = vld [vmem:[#allocation4 + $0x24c] sm:$0xff]
    %v334 = vld [vmem:[#allocation4 + $0x254] sm:$0xf]
    %v335 = vld [vmem:[#allocation4 + $0x258] sm:$0xff]
    %v336 = vld [vmem:[#allocation4 + $0x260] sm:$0xf]
    %v337 = vld [vmem:[#allocation4 + $0x264] sm:$0xff]
    %v338 = vld [vmem:[#allocation4 + $0x26c] sm:$0xf]
    %v339 = vld [vmem:[#allocation4 + $0x270] sm:$0xff]
    %v340 = vld [vmem:[#allocation4 + $0x278] sm:$0xf]
    %v341 = vld [vmem:[#allocation4 + $0x27c] sm:$0xff]
    %v342 = vld [vmem:[#allocation4 + $0x284] sm:$0xf]
    %v343 = vld [vmem:[#allocation4 + $0x288] sm:$0xff]
    %v344 = vld [vmem:[#allocation4 + $0x290] sm:$0xf]
    %v345 = vld [vmem:[#allocation4 + $0x294] sm:$0xff]
    %v346 = vld [vmem:[#allocation4 + $0x29c] sm:$0xf]
    %v347 = vld [vmem:[#allocation4 + $0x2a0] sm:$0xff]
    %v348 = vld [vmem:[#allocation4 + $0x2a8] sm:$0xf]
    %v349 = vld [vmem:[#allocation4 + $0x2ac] sm:$0xff]
    %v350 = vld [vmem:[#allocation4 + $0x2b4] sm:$0xf]
    %v351 = vld [vmem:[#allocation4 + $0x2b8] sm:$0xff]
    %v352 = vld [vmem:[#allocation4 + $0x2c0] sm:$0xf]
    %v353 = vld [vmem:[#allocation4 + $0x2c4] sm:$0xff]
    %v354 = vld [vmem:[#allocation4 + $0x2cc] sm:$0xf]
    %v355 = vld [vmem:[#allocation4 + $0x2d0] sm:$0xff]
    %v356 = vld [vmem:[#allocation4 + $0x2d8] sm:$0xf]
    %v357 = vld [vmem:[#allocation4 + $0x2dc] sm:$0xff]
    %v358 = vld [vmem:[#allocation4 + $0x2e4] sm:$0xf]
    %v359 = vld [vmem:[#allocation4 + $0x2e8] sm:$0xff]
    %v360 = vld [vmem:[#allocation4 + $0x2f0] sm:$0xf]
    %v361 = vld [vmem:[#allocation4 + $0x2f4] sm:$0xff]
    %v362 = vld [vmem:[#allocation4 + $0x2fc] sm:$0xf]
    %v363 = vld [vmem:[%s4] sm:$0x7]
    %v365 = vlaneseq
    %v366 = vshrl.u32 %v365, 7
    %v367 = vsub.s32 0, %v366
    %v368 = vrot.slane %v363, %v367
    %v369 = vlaneseq
    %v370 = vshrl.u32 %v369, 7
    %v371 = vsub.s32 1, %v370
    %v372 = vrot.slane %v363, %v371
    %v373 = vlaneseq
    %v374 = vshrl.u32 %v373, 7
    %v375 = vsub.s32 2, %v374
    %v376 = vrot.slane %v363, %v375
    %v508 = vunpack.c.l.b16 %v235
    %v509 = vunpack.c.h.b16 %v235
    %v510 = vunpack.c.l.b16 %v236
    %v511 = vunpack.c.l.b16 %v237
    %v512 = vunpack.c.h.b16 %v237
    %v513 = vunpack.c.l.b16 %v238
    %v514 = vunpack.c.l.b16 %v239
    %v515 = vunpack.c.h.b16 %v239
    %v516 = vunpack.c.l.b16 %v240
    %v517 = vunpack.c.l.b16 %v241
    %v518 = vunpack.c.h.b16 %v241
    %v519 = vunpack.c.l.b16 %v242
    %v520 = vunpack.c.l.b16 %v243
    %v521 = vunpack.c.h.b16 %v243
    %v522 = vunpack.c.l.b16 %v244
    %v523 = vunpack.c.l.b16 %v245
    %v524 = vunpack.c.h.b16 %v245
    %v525 = vunpack.c.l.b16 %v246
    %v526 = vunpack.c.l.b16 %v247
    %v527 = vunpack.c.h.b16 %v247
    %v528 = vunpack.c.l.b16 %v248
    %v529 = vunpack.c.l.b16 %v249
    %v530 = vunpack.c.h.b16 %v249
    %v531 = vunpack.c.l.b16 %v250
    %v532 = vunpack.c.l.b16 %v251
    %v533 = vunpack.c.h.b16 %v251
    %v534 = vunpack.c.l.b16 %v252
    %v535 = vunpack.c.l.b16 %v253
    %v536 = vunpack.c.h.b16 %v253
    %v537 = vunpack.c.l.b16 %v254
    %v538 = vunpack.c.l.b16 %v255
    %v539 = vunpack.c.h.b16 %v255
    %v540 = vunpack.c.l.b16 %v256
    %v541 = vunpack.c.l.b16 %v257
    %v542 = vunpack.c.h.b16 %v257
    %v543 = vunpack.c.l.b16 %v258
    %v544 = vunpack.c.l.b16 %v259
    %v545 = vunpack.c.h.b16 %v259
    %v546 = vunpack.c.l.b16 %v260
    %v547 = vunpack.c.l.b16 %v261
    %v548 = vunpack.c.h.b16 %v261
    %v549 = vunpack.c.l.b16 %v262
    %v550 = vunpack.c.l.b16 %v263
    %v551 = vunpack.c.h.b16 %v263
    %v552 = vunpack.c.l.b16 %v264
    %v553 = vunpack.c.l.b16 %v265
    %v554 = vunpack.c.h.b16 %v265
    %v555 = vunpack.c.l.b16 %v266
    %v556 = vunpack.c.l.b16 %v267
    %v557 = vunpack.c.h.b16 %v267
    %v558 = vunpack.c.l.b16 %v268
    %v559 = vunpack.c.l.b16 %v269
    %v560 = vunpack.c.h.b16 %v269
    %v561 = vunpack.c.l.b16 %v270
    %v562 = vunpack.c.l.b16 %v271
    %v563 = vunpack.c.h.b16 %v271
    %v564 = vunpack.c.l.b16 %v272
    %v565 = vunpack.c.l.b16 %v273
    %v566 = vunpack.c.h.b16 %v273
    %v567 = vunpack.c.l.b16 %v274
    %v568 = vunpack.c.l.b16 %v275
    %v569 = vunpack.c.h.b16 %v275
    %v570 = vunpack.c.l.b16 %v276
    %v571 = vunpack.c.l.b16 %v277
    %v572 = vunpack.c.h.b16 %v277
    %v573 = vunpack.c.l.b16 %v278
    %v574 = vunpack.c.l.b16 %v279
    %v575 = vunpack.c.h.b16 %v279
    %v576 = vunpack.c.l.b16 %v280
    %v577 = vunpack.c.l.b16 %v281
    %v578 = vunpack.c.h.b16 %v281
    %v579 = vunpack.c.l.b16 %v282
    %v580 = vunpack.c.l.b16 %v283
    %v581 = vunpack.c.h.b16 %v283
    %v582 = vunpack.c.l.b16 %v284
    %v583 = vunpack.c.l.b16 %v285
    %v584 = vunpack.c.h.b16 %v285
    %v585 = vunpack.c.l.b16 %v286
    %v586 = vunpack.c.l.b16 %v287
    %v587 = vunpack.c.h.b16 %v287
    %v588 = vunpack.c.l.b16 %v288
    %v589 = vunpack.c.l.b16 %v289
    %v590 = vunpack.c.h.b16 %v289
    %v591 = vunpack.c.l.b16 %v290
    %v592 = vunpack.c.l.b16 %v291
    %v593 = vunpack.c.h.b16 %v291
    %v594 = vunpack.c.l.b16 %v292
    %v595 = vunpack.c.l.b16 %v293
    %v596 = vunpack.c.h.b16 %v293
    %v597 = vunpack.c.l.b16 %v294
    %v598 = vunpack.c.l.b16 %v295
    %v599 = vunpack.c.h.b16 %v295
    %v600 = vunpack.c.l.b16 %v296
    %v601 = vunpack.c.l.b16 %v297
    %v602 = vunpack.c.h.b16 %v297
    %v603 = vunpack.c.l.b16 %v298
    %v604 = vunpack.c.l.b16 %v299
    %v605 = vunpack.c.h.b16 %v299
    %v606 = vunpack.c.l.b16 %v300
    %v607 = vunpack.c.l.b16 %v301
    %v608 = vunpack.c.h.b16 %v301
    %v609 = vunpack.c.l.b16 %v302
    %v610 = vunpack.c.l.b16 %v303
    %v611 = vunpack.c.h.b16 %v303
    %v612 = vunpack.c.l.b16 %v304
    %v613 = vunpack.c.l.b16 %v305
    %v614 = vunpack.c.h.b16 %v305
    %v615 = vunpack.c.l.b16 %v306
    %v616 = vunpack.c.l.b16 %v307
    %v617 = vunpack.c.h.b16 %v307
    %v618 = vunpack.c.l.b16 %v308
    %v619 = vunpack.c.l.b16 %v309
    %v620 = vunpack.c.h.b16 %v309
    %v621 = vunpack.c.l.b16 %v310
    %v622 = vunpack.c.l.b16 %v311
    %v623 = vunpack.c.h.b16 %v311
    %v624 = vunpack.c.l.b16 %v312
    %v625 = vunpack.c.l.b16 %v313
    %v626 = vunpack.c.h.b16 %v313
    %v627 = vunpack.c.l.b16 %v314
    %v628 = vunpack.c.l.b16 %v315
    %v629 = vunpack.c.h.b16 %v315
    %v630 = vunpack.c.l.b16 %v316
    %v631 = vunpack.c.l.b16 %v317
    %v632 = vunpack.c.h.b16 %v317
    %v633 = vunpack.c.l.b16 %v318
    %v634 = vunpack.c.l.b16 %v319
    %v635 = vunpack.c.h.b16 %v319
    %v636 = vunpack.c.l.b16 %v320
    %v637 = vunpack.c.l.b16 %v321
    %v638 = vunpack.c.h.b16 %v321
    %v639 = vunpack.c.l.b16 %v322
    %v640 = vunpack.c.l.b16 %v323
    %v641 = vunpack.c.h.b16 %v323
    %v642 = vunpack.c.l.b16 %v324
    %v643 = vunpack.c.l.b16 %v325
    %v644 = vunpack.c.h.b16 %v325
    %v645 = vunpack.c.l.b16 %v326
    %v646 = vunpack.c.l.b16 %v327
    %v647 = vunpack.c.h.b16 %v327
    %v648 = vunpack.c.l.b16 %v328
    %v649 = vunpack.c.l.b16 %v329
    %v650 = vunpack.c.h.b16 %v329
    %v651 = vunpack.c.l.b16 %v330
    %v652 = vunpack.c.l.b16 %v331
    %v653 = vunpack.c.h.b16 %v331
    %v654 = vunpack.c.l.b16 %v332
    %v655 = vunpack.c.l.b16 %v333
    %v656 = vunpack.c.h.b16 %v333
    %v657 = vunpack.c.l.b16 %v334
    %v658 = vunpack.c.l.b16 %v335
    %v659 = vunpack.c.h.b16 %v335
    %v660 = vunpack.c.l.b16 %v336
    %v661 = vunpack.c.l.b16 %v337
    %v662 = vunpack.c.h.b16 %v337
    %v663 = vunpack.c.l.b16 %v338
    %v664 = vunpack.c.l.b16 %v339
    %v665 = vunpack.c.h.b16 %v339
    %v666 = vunpack.c.l.b16 %v340
    %v667 = vunpack.c.l.b16 %v341
    %v668 = vunpack.c.h.b16 %v341
    %v669 = vunpack.c.l.b16 %v342
    %v670 = vunpack.c.l.b16 %v343
    %v671 = vunpack.c.h.b16 %v343
    %v672 = vunpack.c.l.b16 %v344
    %v673 = vunpack.c.l.b16 %v345
    %v674 = vunpack.c.h.b16 %v345
    %v675 = vunpack.c.l.b16 %v346
    %v676 = vunpack.c.l.b16 %v347
    %v677 = vunpack.c.h.b16 %v347
    %v678 = vunpack.c.l.b16 %v348
    %v679 = vunpack.c.l.b16 %v349
    %v680 = vunpack.c.h.b16 %v349
    %v681 = vunpack.c.l.b16 %v350
    %v682 = vunpack.c.l.b16 %v351
    %v683 = vunpack.c.h.b16 %v351
    %v684 = vunpack.c.l.b16 %v352
    %v685 = vunpack.c.l.b16 %v353
    %v686 = vunpack.c.h.b16 %v353
    %v687 = vunpack.c.l.b16 %v354
    %v688 = vunpack.c.l.b16 %v355
    %v689 = vunpack.c.h.b16 %v355
    %v690 = vunpack.c.l.b16 %v356
    %v691 = vunpack.c.l.b16 %v357
    %v692 = vunpack.c.h.b16 %v357
    %v693 = vunpack.c.l.b16 %v358
    %v694 = vunpack.c.l.b16 %v359
    %v695 = vunpack.c.h.b16 %v359
    %v696 = vunpack.c.l.b16 %v360
    %v697 = vunpack.c.l.b16 %v361
    %v698 = vunpack.c.h.b16 %v361
    %v699 = vunpack.c.l.b16 %v362
    %v700 = vpack.c.b16 %v511, %v508
    %v701 = vpack.c.b16 %v512, %v509
    %v702 = vpack.c.b16 %v513, %v510
    %v703 = vpack.c.b16 %v517, %v514
    %v704 = vpack.c.b16 %v518, %v515
    %v705 = vpack.c.b16 %v519, %v516
    %v706 = vpack.c.b16 %v523, %v520
    %v707 = vpack.c.b16 %v524, %v521
    %v708 = vpack.c.b16 %v525, %v522
    %v709 = vpack.c.b16 %v529, %v526
    %v710 = vpack.c.b16 %v530, %v527
    %v711 = vpack.c.b16 %v531, %v528
    %v712 = vpack.c.b16 %v535, %v532
    %v713 = vpack.c.b16 %v536, %v533
    %v714 = vpack.c.b16 %v537, %v534
    %v715 = vpack.c.b16 %v541, %v538
    %v716 = vpack.c.b16 %v542, %v539
    %v717 = vpack.c.b16 %v543, %v540
    %v718 = vpack.c.b16 %v547, %v544
    %v719 = vpack.c.b16 %v548, %v545
    %v720 = vpack.c.b16 %v549, %v546
    %v721 = vpack.c.b16 %v553, %v550
    %v722 = vpack.c.b16 %v554, %v551
    %v723 = vpack.c.b16 %v555, %v552
    %v724 = vpack.c.b16 %v559, %v556
    %v725 = vpack.c.b16 %v560, %v557
    %v726 = vpack.c.b16 %v561, %v558
    %v727 = vpack.c.b16 %v565, %v562
    %v728 = vpack.c.b16 %v566, %v563
    %v729 = vpack.c.b16 %v567, %v564
    %v730 = vpack.c.b16 %v571, %v568
    %v731 = vpack.c.b16 %v572, %v569
    %v732 = vpack.c.b16 %v573, %v570
    %v733 = vpack.c.b16 %v577, %v574
    %v734 = vpack.c.b16 %v578, %v575
    %v735 = vpack.c.b16 %v579, %v576
    %v736 = vpack.c.b16 %v583, %v580
    %v737 = vpack.c.b16 %v584, %v581
    %v738 = vpack.c.b16 %v585, %v582
    %v739 = vpack.c.b16 %v589, %v586
    %v740 = vpack.c.b16 %v590, %v587
    %v741 = vpack.c.b16 %v591, %v588
    %v742 = vpack.c.b16 %v595, %v592
    %v743 = vpack.c.b16 %v596, %v593
    %v744 = vpack.c.b16 %v597, %v594
    %v745 = vpack.c.b16 %v601, %v598
    %v746 = vpack.c.b16 %v602, %v599
    %v747 = vpack.c.b16 %v603, %v600
    %v748 = vpack.c.b16 %v607, %v604
    %v749 = vpack.c.b16 %v608, %v605
    %v750 = vpack.c.b16 %v609, %v606
    %v751 = vpack.c.b16 %v613, %v610
    %v752 = vpack.c.b16 %v614, %v611
    %v753 = vpack.c.b16 %v615, %v612
    %v754 = vpack.c.b16 %v619, %v616
    %v755 = vpack.c.b16 %v620, %v617
    %v756 = vpack.c.b16 %v621, %v618
    %v757 = vpack.c.b16 %v625, %v622
    %v758 = vpack.c.b16 %v626, %v623
    %v759 = vpack.c.b16 %v627, %v624
    %v760 = vpack.c.b16 %v631, %v628
    %v761 = vpack.c.b16 %v632, %v629
    %v762 = vpack.c.b16 %v633, %v630
    %v763 = vpack.c.b16 %v637, %v634
    %v764 = vpack.c.b16 %v638, %v635
    %v765 = vpack.c.b16 %v639, %v636
    %v766 = vpack.c.b16 %v643, %v640
    %v767 = vpack.c.b16 %v644, %v641
    %v768 = vpack.c.b16 %v645, %v642
    %v769 = vpack.c.b16 %v649, %v646
    %v770 = vpack.c.b16 %v650, %v647
    %v771 = vpack.c.b16 %v651, %v648
    %v772 = vpack.c.b16 %v655, %v652
    %v773 = vpack.c.b16 %v656, %v653
    %v774 = vpack.c.b16 %v657, %v654
    %v775 = vpack.c.b16 %v661, %v658
    %v776 = vpack.c.b16 %v662, %v659
    %v777 = vpack.c.b16 %v663, %v660
    %v778 = vpack.c.b16 %v667, %v664
    %v779 = vpack.c.b16 %v668, %v665
    %v780 = vpack.c.b16 %v669, %v666
    %v781 = vpack.c.b16 %v673, %v670
    %v782 = vpack.c.b16 %v674, %v671
    %v783 = vpack.c.b16 %v675, %v672
    %v784 = vpack.c.b16 %v679, %v676
    %v785 = vpack.c.b16 %v680, %v677
    %v786 = vpack.c.b16 %v681, %v678
    %v787 = vpack.c.b16 %v685, %v682
    %v788 = vpack.c.b16 %v686, %v683
    %v789 = vpack.c.b16 %v687, %v684
    %v790 = vpack.c.b16 %v691, %v688
    %v791 = vpack.c.b16 %v692, %v689
    %v792 = vpack.c.b16 %v693, %v690
    %v793 = vpack.c.b16 %v697, %v694
    %v794 = vpack.c.b16 %v698, %v695
    %v795 = vpack.c.b16 %v699, %v696
    %892 = vmatprep.subr.bf16.mxu0 %v701
    %893 = vmatpush1.bf16.msra.mxu0 %v700
    %894 = vmatprep.subr.bf16.mxu0 %v704
    %895 = vmatpush1.bf16.msra.mxu0 %v703
    %896 = vmatprep.subr.bf16.mxu0 %v707
    %897 = vmatpush1.bf16.msra.mxu0 %v706
    %898 = vmatprep.subr.bf16.mxu0 %v710
    %899 = vmatpush1.bf16.msra.mxu0 %v709
    %900 = vmatprep.subr.bf16.mxu0 %v713
    %901 = vmatpush1.bf16.msra.mxu0 %v712
    %902 = vmatprep.subr.bf16.mxu0 %v716
    %903 = vmatpush1.bf16.msra.mxu0 %v715
    %904 = vmatprep.subr.bf16.mxu0 %v719
    %905 = vmatpush1.bf16.msra.mxu0 %v718
    %906 = vmatprep.subr.bf16.mxu0 %v722
    %907 = vmatpush1.bf16.msra.mxu0 %v721
    %908 = vmatprep.subr.bf16.mxu0 %v725
    %909 = vmatpush1.bf16.msra.mxu0 %v724
    %910 = vmatprep.subr.bf16.mxu0 %v728
    %911 = vmatpush1.bf16.msra.mxu0 %v727
    %912 = vmatprep.subr.bf16.mxu0 %v731
    %913 = vmatpush1.bf16.msra.mxu0 %v730
    %914 = vmatprep.subr.bf16.mxu0 %v734
    %915 = vmatpush1.bf16.msra.mxu0 %v733
    %916 = vmatprep.subr.bf16.mxu0 %v737
    %917 = vmatpush1.bf16.msra.mxu0 %v736
    %918 = vmatprep.subr.bf16.mxu0 %v740
    %919 = vmatpush1.bf16.msra.mxu0 %v739
    %920 = vmatprep.subr.bf16.mxu0 %v743
    %921 = vmatpush1.bf16.msra.mxu0 %v742
    %922 = vmatprep.subr.bf16.mxu0 %v746
    %923 = vmatpush1.bf16.msra.mxu0 %v745
    %924 = vmatprep.mubr.bf16.mxu0 %v232
    %925 = vmatmul.mubr.bf16.gmra.mrb[0].mxu0 %v231
    %v926 = vpop.f32.mrb[0].mxu0
    %v927 = vadd.f32 %v368, %v926
    %v928 = vpop.f32.mrb[0].mxu0
    %v929 = vadd.f32 %v372, %v928
    %v930 = vpop.f32.mrb[0].mxu0
    %v931 = vpop.f32.mrb[0].mxu0
    %932 = vdwg.mxu0
    %933 = vmatprep.subr.bf16.mxu0 %v749
    %934 = vmatpush1.bf16.msra.mxu0 %v748
    %935 = vmatprep.subr.bf16.mxu0 %v752
    %936 = vmatpush1.bf16.msra.mxu0 %v751
    %937 = vmatprep.subr.bf16.mxu0 %v755
    %938 = vmatpush1.bf16.msra.mxu0 %v754
    %939 = vmatprep.subr.bf16.mxu0 %v758
    %940 = vmatpush1.bf16.msra.mxu0 %v757
    %941 = vmatprep.subr.bf16.mxu0 %v761
    %942 = vmatpush1.bf16.msra.mxu0 %v760
    %943 = vmatprep.subr.bf16.mxu0 %v764
    %944 = vmatpush1.bf16.msra.mxu0 %v763
    %945 = vmatprep.subr.bf16.mxu0 %v767
    %946 = vmatpush1.bf16.msra.mxu0 %v766
    %947 = vmatprep.subr.bf16.mxu0 %v770
    %948 = vmatpush1.bf16.msra.mxu0 %v769
    %949 = vmatprep.subr.bf16.mxu0 %v773
    %950 = vmatpush1.bf16.msra.mxu0 %v772
    %951 = vmatprep.subr.bf16.mxu0 %v776
    %952 = vmatpush1.bf16.msra.mxu0 %v775
    %953 = vmatprep.subr.bf16.mxu0 %v779
    %954 = vmatpush1.bf16.msra.mxu0 %v778
    %955 = vmatprep.subr.bf16.mxu0 %v782
    %956 = vmatpush1.bf16.msra.mxu0 %v781
    %957 = vmatprep.subr.bf16.mxu0 %v785
    %958 = vmatpush1.bf16.msra.mxu0 %v784
    %959 = vmatprep.subr.bf16.mxu0 %v788
    %960 = vmatpush1.bf16.msra.mxu0 %v787
    %961 = vmatprep.subr.bf16.mxu0 %v791
    %962 = vmatpush1.bf16.msra.mxu0 %v790
    %963 = vmatprep.subr.bf16.mxu0 %v794
    %964 = vmatpush1.bf16.msra.mxu0 %v793
    %965 = vmatprep.mubr.bf16.mxu0 %v234
    %966 = vmatmul.mubr.bf16.gmra.mrb[0].mxu0 %v233
    %v967 = vpop.f32.mrb[0].mxu0
    %v968 = vadd.f32 %v927, %v967
    %v969 = vpop.f32.mrb[0].mxu0
    %v970 = vadd.f32 %v929, %v969
    %v971 = vpop.f32.mrb[0].mxu0
    %v972 = vpop.f32.mrb[0].mxu0
    %973 = vdwg.mxu0
    %974 = vmatprep.subr.bf16.mxu0 0
    %975 = vmatpush1.bf16.msra.mxu0 %v702
    %976 = vmatprep.subr.bf16.mxu0 0
    %977 = vmatpush1.bf16.msra.mxu0 %v705
    %978 = vmatprep.subr.bf16.mxu0 0
    %979 = vmatpush1.bf16.msra.mxu0 %v708
    %980 = vmatprep.subr.bf16.mxu0 0
    %981 = vmatpush1.bf16.msra.mxu0 %v711
    %982 = vmatprep.subr.bf16.mxu0 0
    %983 = vmatpush1.bf16.msra.mxu0 %v714
    %984 = vmatprep.subr.bf16.mxu0 0
    %985 = vmatpush1.bf16.msra.mxu0 %v717
    %986 = vmatprep.subr.bf16.mxu0 0
    %987 = vmatpush1.bf16.msra.mxu0 %v720
    %988 = vmatprep.subr.bf16.mxu0 0
    %989 = vmatpush1.bf16.msra.mxu0 %v723
    %990 = vmatprep.subr.bf16.mxu0 0
    %991 = vmatpush1.bf16.msra.mxu0 %v726
    %992 = vmatprep.subr.bf16.mxu0 0
    %993 = vmatpush1.bf16.msra.mxu0 %v729
    %994 = vmatprep.subr.bf16.mxu0 0
    %995 = vmatpush1.bf16.msra.mxu0 %v732
    %996 = vmatprep.subr.bf16.mxu0 0
    %997 = vmatpush1.bf16.msra.mxu0 %v735
    %998 = vmatprep.subr.bf16.mxu0 0
    %999 = vmatpush1.bf16.msra.mxu0 %v738
    %1000 = vmatprep.subr.bf16.mxu0 0
    %1001 = vmatpush1.bf16.msra.mxu0 %v741
    %1002 = vmatprep.subr.bf16.mxu0 0
    %1003 = vmatpush1.bf16.msra.mxu0 %v744
    %1004 = vmatprep.subr.bf16.mxu0 0
    %1005 = vmatpush1.bf16.msra.mxu0 %v747
    %1006 = vmatprep.mubr.bf16.mxu0 %v232
    %1007 = vmatmul.mubr.bf16.gmra.mrb[0].mxu0 %v231
    %v1008 = vpop.f32.mrb[0].mxu0
    %v1009 = vadd.f32 %v376, %v1008
    %v1010 = vpop.f32.mrb[0].mxu0
    %v1011 = vpop.f32.mrb[0].mxu0
    %v1012 = vpop.f32.mrb[0].mxu0
    %1013 = vdwg.mxu0
    %1014 = vmatprep.subr.bf16.mxu0 0
    %1015 = vmatpush1.bf16.msra.mxu0 %v750
    %1016 = vmatprep.subr.bf16.mxu0 0
    %1017 = vmatpush1.bf16.msra.mxu0 %v753
    %1018 = vmatprep.subr.bf16.mxu0 0
    %1019 = vmatpush1.bf16.msra.mxu0 %v756
    %1020 = vmatprep.subr.bf16.mxu0 0
    %1021 = vmatpush1.bf16.msra.mxu0 %v759
    %1022 = vmatprep.subr.bf16.mxu0 0
    %1023 = vmatpush1.bf16.msra.mxu0 %v762
    %1024 = vmatprep.subr.bf16.mxu0 0
    %1025 = vmatpush1.bf16.msra.mxu0 %v765
    %1026 = vmatprep.subr.bf16.mxu0 0
    %1027 = vmatpush1.bf16.msra.mxu0 %v768
    %1028 = vmatprep.subr.bf16.mxu0 0
    %1029 = vmatpush1.bf16.msra.mxu0 %v771
    %1030 = vmatprep.subr.bf16.mxu0 0
    %1031 = vmatpush1.bf16.msra.mxu0 %v774
    %1032 = vmatprep.subr.bf16.mxu0 0
    %1033 = vmatpush1.bf16.msra.mxu0 %v777
    %1034 = vmatprep.subr.bf16.mxu0 0
    %1035 = vmatpush1.bf16.msra.mxu0 %v780
    %1036 = vmatprep.subr.bf16.mxu0 0
    %1037 = vmatpush1.bf16.msra.mxu0 %v783
    %1038 = vmatprep.subr.bf16.mxu0 0
    %1039 = vmatpush1.bf16.msra.mxu0 %v786
    %1040 = vmatprep.subr.bf16.mxu0 0
    %1041 = vmatpush1.bf16.msra.mxu0 %v789
    %1042 = vmatprep.subr.bf16.mxu0 0
    %1043 = vmatpush1.bf16.msra.mxu0 %v792
    %1044 = vmatprep.subr.bf16.mxu0 0
    %1045 = vmatpush1.bf16.msra.mxu0 %v795
    %1046 = vmatprep.mubr.bf16.mxu0 %v234
    %1047 = vmatmul.mubr.bf16.gmra.mrb[0].mxu0 %v233
    %v1048 = vpop.f32.mrb[0].mxu0
    %v1049 = vadd.f32 %v1009, %v1048
    %v1050 = vpop.f32.mrb[0].mxu0
    %v1051 = vpop.f32.mrb[0].mxu0
    %v1052 = vpop.f32.mrb[0].mxu0
    %1053 = vdwg.mxu0
    %v1054 = vmax.f32 %v968, 0.0
    %v1055 = vmax.f32 %v970, 0.0
    %v1056 = vmax.f32 %v1049, 0.0
    %v1057 = vpack.c.bf16 %v1054, %v1054
    %v1058 = vpack.c.bf16 %v1055, %v1055
    %v1059 = vpack.c.bf16 %v1056, %v1056
    %v1060 = vld [vmem:[#allocation6] sm:$0xf]
    %v1061 = vld [vmem:[#allocation6 + $0x4] sm:$0xf]
    %v1062 = vld [vmem:[#allocation6 + $0x8] sm:$0xf]
    %v1063 = vld [vmem:[#allocation6 + $0xc] sm:$0xf]
    %v1064 = vld [vmem:[#allocation6 + $0x10] sm:$0xf]
    %v1065 = vld [vmem:[#allocation6 + $0x14] sm:$0xf]
    %v1066 = vld [vmem:[#allocation6 + $0x18] sm:$0xf]
    %v1067 = vld [vmem:[#allocation6 + $0x1c] sm:$0xf]
    %v1068 = vld [vmem:[#allocation6 + $0x20] sm:$0xf]
    %v1069 = vld [vmem:[#allocation6 + $0x24] sm:$0xf]
    %v1070 = vld [vmem:[#allocation6 + $0x28] sm:$0xf]
    %v1071 = vld [vmem:[#allocation6 + $0x2c] sm:$0xf]
    %v1072 = vld [vmem:[#allocation6 + $0x30] sm:$0xf]
    %v1073 = vld [vmem:[#allocation6 + $0x34] sm:$0xf]
    %v1074 = vld [vmem:[#allocation6 + $0x38] sm:$0xf]
    %v1075 = vld [vmem:[#allocation6 + $0x3c] sm:$0xf]
    %v1076 = vld [vmem:[#allocation6 + $0x40] sm:$0xf]
    %v1077 = vld [vmem:[#allocation6 + $0x44] sm:$0xf]
    %v1078 = vld [vmem:[#allocation6 + $0x48] sm:$0xf]
    %v1079 = vld [vmem:[#allocation6 + $0x4c] sm:$0xf]
    %v1080 = vld [vmem:[#allocation6 + $0x50] sm:$0xf]
    %v1081 = vld [vmem:[#allocation6 + $0x54] sm:$0xf]
    %v1082 = vld [vmem:[#allocation6 + $0x58] sm:$0xf]
    %v1083 = vld [vmem:[#allocation6 + $0x5c] sm:$0xf]
    %v1084 = vld [vmem:[#allocation6 + $0x60] sm:$0xf]
    %v1085 = vld [vmem:[#allocation6 + $0x64] sm:$0xf]
    %v1086 = vld [vmem:[#allocation6 + $0x68] sm:$0xf]
    %v1087 = vld [vmem:[#allocation6 + $0x6c] sm:$0xf]
    %v1088 = vld [vmem:[#allocation6 + $0x70] sm:$0xf]
    %v1089 = vld [vmem:[#allocation6 + $0x74] sm:$0xf]
    %v1090 = vld [vmem:[#allocation6 + $0x78] sm:$0xf]
    %v1091 = vld [vmem:[#allocation6 + $0x7c] sm:$0xf]
    %v1092 = vld [vmem:[#allocation6 + $0x80] sm:$0xf]
    %v1093 = vld [vmem:[#allocation6 + $0x84] sm:$0xf]
    %v1094 = vld [vmem:[#allocation6 + $0x88] sm:$0xf]
    %v1095 = vld [vmem:[#allocation6 + $0x8c] sm:$0xf]
    %v1096 = vld [vmem:[#allocation6 + $0x90] sm:$0xf]
    %v1097 = vld [vmem:[#allocation6 + $0x94] sm:$0xf]
    %v1098 = vld [vmem:[#allocation6 + $0x98] sm:$0xf]
    %v1099 = vld [vmem:[#allocation6 + $0x9c] sm:$0xf]
    %v1100 = vld [vmem:[#allocation6 + $0xa0] sm:$0xf]
    %v1101 = vld [vmem:[#allocation6 + $0xa4] sm:$0xf]
    %v1102 = vld [vmem:[#allocation6 + $0xa8] sm:$0xf]
    %v1103 = vld [vmem:[#allocation6 + $0xac] sm:$0xf]
    %v1104 = vld [vmem:[#allocation6 + $0xb0] sm:$0xf]
    %v1105 = vld [vmem:[#allocation6 + $0xb4] sm:$0xf]
    %v1106 = vld [vmem:[#allocation6 + $0xb8] sm:$0xf]
    %v1107 = vld [vmem:[#allocation6 + $0xbc] sm:$0xf]
    %v1156 = vunpack.c.l.b16 %v1060
    %v1157 = vunpack.c.l.b16 %v1061
    %v1158 = vunpack.c.l.b16 %v1062
    %v1159 = vunpack.c.l.b16 %v1063
    %v1160 = vunpack.c.l.b16 %v1064
    %v1161 = vunpack.c.l.b16 %v1065
    %v1162 = vunpack.c.l.b16 %v1066
    %v1163 = vunpack.c.l.b16 %v1067
    %v1164 = vunpack.c.l.b16 %v1068
    %v1165 = vunpack.c.l.b16 %v1069
    %v1166 = vunpack.c.l.b16 %v1070
    %v1167 = vunpack.c.l.b16 %v1071
    %v1168 = vunpack.c.l.b16 %v1072
    %v1169 = vunpack.c.l.b16 %v1073
    %v1170 = vunpack.c.l.b16 %v1074
    %v1171 = vunpack.c.l.b16 %v1075
    %v1172 = vunpack.c.l.b16 %v1076
    %v1173 = vunpack.c.l.b16 %v1077
    %v1174 = vunpack.c.l.b16 %v1078
    %v1175 = vunpack.c.l.b16 %v1079
    %v1176 = vunpack.c.l.b16 %v1080
    %v1177 = vunpack.c.l.b16 %v1081
    %v1178 = vunpack.c.l.b16 %v1082
    %v1179 = vunpack.c.l.b16 %v1083
    %v1180 = vunpack.c.l.b16 %v1084
    %v1181 = vunpack.c.l.b16 %v1085
    %v1182 = vunpack.c.l.b16 %v1086
    %v1183 = vunpack.c.l.b16 %v1087
    %v1184 = vunpack.c.l.b16 %v1088
    %v1185 = vunpack.c.l.b16 %v1089
    %v1186 = vunpack.c.l.b16 %v1090
    %v1187 = vunpack.c.l.b16 %v1091
    %v1188 = vunpack.c.l.b16 %v1092
    %v1189 = vunpack.c.l.b16 %v1093
    %v1190 = vunpack.c.l.b16 %v1094
    %v1191 = vunpack.c.l.b16 %v1095
    %v1192 = vunpack.c.l.b16 %v1096
    %v1193 = vunpack.c.l.b16 %v1097
    %v1194 = vunpack.c.l.b16 %v1098
    %v1195 = vunpack.c.l.b16 %v1099
    %v1196 = vunpack.c.l.b16 %v1100
    %v1197 = vunpack.c.l.b16 %v1101
    %v1198 = vunpack.c.l.b16 %v1102
    %v1199 = vunpack.c.l.b16 %v1103
    %v1200 = vunpack.c.l.b16 %v1104
    %v1201 = vunpack.c.l.b16 %v1105
    %v1202 = vunpack.c.l.b16 %v1106
    %v1203 = vunpack.c.l.b16 %v1107
    %v1204 = vpack.c.b16 %v1157, %v1156
    %v1205 = vpack.c.b16 %v1159, %v1158
    %v1206 = vpack.c.b16 %v1161, %v1160
    %v1207 = vpack.c.b16 %v1163, %v1162
    %v1208 = vpack.c.b16 %v1165, %v1164
    %v1209 = vpack.c.b16 %v1167, %v1166
    %v1210 = vpack.c.b16 %v1169, %v1168
    %v1211 = vpack.c.b16 %v1171, %v1170
    %v1212 = vpack.c.b16 %v1173, %v1172
    %v1213 = vpack.c.b16 %v1175, %v1174
    %v1214 = vpack.c.b16 %v1177, %v1176
    %v1215 = vpack.c.b16 %v1179, %v1178
    %v1216 = vpack.c.b16 %v1181, %v1180
    %v1217 = vpack.c.b16 %v1183, %v1182
    %v1218 = vpack.c.b16 %v1185, %v1184
    %v1219 = vpack.c.b16 %v1187, %v1186
    %v1220 = vpack.c.b16 %v1189, %v1188
    %v1221 = vpack.c.b16 %v1191, %v1190
    %v1222 = vpack.c.b16 %v1193, %v1192
    %v1223 = vpack.c.b16 %v1195, %v1194
    %v1224 = vpack.c.b16 %v1197, %v1196
    %v1225 = vpack.c.b16 %v1199, %v1198
    %v1226 = vpack.c.b16 %v1201, %v1200
    %v1227 = vpack.c.b16 %v1203, %v1202
    %1252 = vmatprep.subr.bf16.mxu0 0
    %1253 = vmatpush1.bf16.msra.mxu0 %v1204
    %1254 = vmatprep.subr.bf16.mxu0 0
    %1255 = vmatpush1.bf16.msra.mxu0 %v1205
    %1256 = vmatprep.subr.bf16.mxu0 0
    %1257 = vmatpush1.bf16.msra.mxu0 %v1206
    %1258 = vmatprep.subr.bf16.mxu0 0
    %1259 = vmatpush1.bf16.msra.mxu0 %v1207
    %1260 = vmatprep.subr.bf16.mxu0 0
    %1261 = vmatpush1.bf16.msra.mxu0 %v1208
    %1262 = vmatprep.subr.bf16.mxu0 0
    %1263 = vmatpush1.bf16.msra.mxu0 %v1209
    %1264 = vmatprep.subr.bf16.mxu0 0
    %1265 = vmatpush1.bf16.msra.mxu0 %v1210
    %1266 = vmatprep.subr.bf16.mxu0 0
    %1267 = vmatpush1.bf16.msra.mxu0 %v1211
    %1268 = vmatprep.subr.bf16.mxu0 0
    %1269 = vmatpush1.bf16.msra.mxu0 %v1212
    %1270 = vmatprep.subr.bf16.mxu0 0
    %1271 = vmatpush1.bf16.msra.mxu0 %v1213
    %1272 = vmatprep.subr.bf16.mxu0 0
    %1273 = vmatpush1.bf16.msra.mxu0 %v1214
    %1274 = vmatprep.subr.bf16.mxu0 0
    %1275 = vmatpush1.bf16.msra.mxu0 %v1215
    %1276 = vmatprep.subr.bf16.mxu0 0
    %1277 = vmatpush1.bf16.msra.mxu0 %v1216
    %1278 = vmatprep.subr.bf16.mxu0 0
    %1279 = vmatpush1.bf16.msra.mxu0 %v1217
    %1280 = vmatprep.subr.bf16.mxu0 0
    %1281 = vmatpush1.bf16.msra.mxu0 %v1218
    %1282 = vmatprep.subr.bf16.mxu0 0
    %1283 = vmatpush1.bf16.msra.mxu0 %v1219
    %1284 = vmatprep.mubr.bf16.mxu0 %v1058
    %1285 = vmatmul.mubr.bf16.gmra.mrb[0].mxu0 %v1057
    %v1286 = vpop.f32.mrb[0].mxu0
    %v1287 = vadd.f32 0.0, %v1286
    %v1288 = vpop.f32.mrb[0].mxu0
    %v1289 = vpop.f32.mrb[0].mxu0
    %v1290 = vpop.f32.mrb[0].mxu0
    %1291 = vdwg.mxu0
    %1292 = vmatprep.subr.bf16.mxu0 0
    %1293 = vmatpush1.bf16.msra.mxu0 %v1220
    %1294 = vmatprep.subr.bf16.mxu0 0
    %1295 = vmatpush1.bf16.msra.mxu0 %v1221
    %1296 = vmatprep.subr.bf16.mxu0 0
    %1297 = vmatpush1.bf16.msra.mxu0 %v1222
    %1298 = vmatprep.subr.bf16.mxu0 0
    %1299 = vmatpush1.bf16.msra.mxu0 %v1223
    %1300 = vmatprep.subr.bf16.mxu0 0
    %1301 = vmatpush1.bf16.msra.mxu0 %v1224
    %1302 = vmatprep.subr.bf16.mxu0 0
    %1303 = vmatpush1.bf16.msra.mxu0 %v1225
    %1304 = vmatprep.subr.bf16.mxu0 0
    %1305 = vmatpush1.bf16.msra.mxu0 %v1226
    %1306 = vmatprep.subr.bf16.mxu0 0
    %1307 = vmatpush1.bf16.msra.mxu0 %v1227
    %1308 = vmatprep.subr.bf16.mxu0 0
    %1309 = vmatpush1.bf16.msra.mxu0 0
    %1310 = vmatprep.subr.bf16.mxu0 0
    %1311 = vmatpush1.bf16.msra.mxu0 0
    %1312 = vmatprep.subr.bf16.mxu0 0
    %1313 = vmatpush1.bf16.msra.mxu0 0
    %1314 = vmatprep.subr.bf16.mxu0 0
    %1315 = vmatpush1.bf16.msra.mxu0 0
    %1316 = vmatprep.subr.bf16.mxu0 0
    %1317 = vmatpush1.bf16.msra.mxu0 0
    %1318 = vmatprep.subr.bf16.mxu0 0
    %1319 = vmatpush1.bf16.msra.mxu0 0
    %1320 = vmatprep.subr.bf16.mxu0 0
    %1321 = vmatpush1.bf16.msra.mxu0 0
    %1322 = vmatprep.subr.bf16.mxu0 0
    %1323 = vmatpush1.bf16.msra.mxu0 0
    %1324 = vmatprep.mubr.bf16.mxu0 0
    %1325 = vmatmul.mubr.bf16.gmra.mrb[0].mxu0 %v1059
    %v1326 = vpop.f32.mrb[0].mxu0
    %v1327 = vadd.f32 %v1287, %v1326
    %v1328 = vpop.f32.mrb[0].mxu0
    %v1329 = vpop.f32.mrb[0].mxu0
    %v1330 = vpop.f32.mrb[0].mxu0
    %1331 = vdwg.mxu0
    %v1332 = vld [vmem:[%s6] sm:$0x1]
    %v1334 = vlaneseq
    %v1335 = vshrl.u32 %v1334, 7
    %v1336 = vsub.s32 0, %v1335
    %v1337 = vrot.slane %v1332, %v1336
    %v1339 = vadd.f32 %v1327, %v1337
    %v1340 = vtanh.pop %v1339
    %vm1341 = vcmask 64512
    %1342 = vst.msk [vmem:[%s7] sm:$0xff] %vm1341, %v1340
    // Predicated region
    $region42: #{actor_forward.1} parent=1 // pred_check
      _
    $region43: #{actor_forward.1} parent=1 // pred_check_branch
      %1344 = sbr.rel (0) target = $region45
    $region44: #{actor_forward.1} parent=1 // pred_region
      _
    $region45: #{actor_forward.1} parent=1 // pred_fallthru
      _
    // Predicated region
    $region46: #{actor_forward.1} parent=1 // pred_check
      _
    $region47: #{actor_forward.1} parent=1 // pred_check_branch
      %1346 = sbr.rel (0) target = $region49
    $region48: #{actor_forward.1} parent=1 // pred_region
      _
    $region49: #{actor_forward.1} parent=1 // pred_fallthru
      _
    %1347 = vsyncpa [#allocation3], 1
    %1348 = vsyncpa [#allocation5], 1

</llo_original>
